<compile_context>
chip_gen: v6e
topology: v6e:2x2x1
jax: 0.10.0
libtpu: 0.0.40
codegen_flags: <defaults>
</compile_context>

<pallas_src>
import functools

import numpy as np
import jax
import jax.numpy as jnp
from jax.experimental import pallas as pl
from jax.experimental.pallas import tpu as pltpu

_BN_EPS = 1e-5
_LANES = 128


def _round_up(x, m):
    return ((x + m - 1) // m) * m


def _vmem_limit_bytes(tb):
    """Per-generation VMEM budget: ~75% of physical, with a sane floor."""
    cap = 64 << 20  # smallest per-TensorCore VMEM across generations (v7x)
    try:
        info = pltpu.get_tpu_info()
        cap = int(getattr(info, "vmem_capacity_bytes", cap)) or cap
    except Exception:
        pass
    # 2 streamed inputs x 2 pipeline buffers + ~6 live (TB,32) f32 intermediates
    # (each lane-padded to 128) + weights/headroom.
    need = 10 * tb * 512 + (4 << 20)
    return int(min(max(need, 8 << 20), cap * 3 // 4))


def _q_pre_kernel(s_ref, a_ref, wcat_ref, bcat_ref, w2_ref, b2_ref, out_ref,
                  *, embed_dim):
    """One batch block: q_pre = relu(<act, hyper_w_1(s)> + hyper_b_1(s)), lane-dense."""
    E = embed_dim
    s = s_ref[...].astype(jnp.float32)                         # (TB, S)
    a = a_ref[...].astype(jnp.float32)                         # (TB, E)

    # hyper_w_1 layer 0 and hyper_b_1, fused into one MXU matmul: [W1 | wb].
    hf = jnp.dot(s, wcat_ref[...],
                 preferred_element_type=jnp.float32) + bcat_ref[...]   # (TB, E+1)
    h = jnp.maximum(hf[:, :E], 0.0)                            # ReLU branch (TB, E)
    b1 = hf[:, E:E + 1]                                        # hyper_b_1 out (TB, 1)

    # hyper_w_1 layer 1.
    w1o = jnp.dot(h, w2_ref[...],
                  preferred_element_type=jnp.float32) + b2_ref[...]    # (TB, E)

    # torch.bmm((B,1,E),(B,E,1)) == per-row dot over E.  Spread b1/E across the
    # E product terms (exact for power-of-2 E; ~1-ulp reassociation otherwise)
    # so a single transpose + sublane reduce yields the lane-dense (1, TB) row.
    t = a * w1o + b1 * (1.0 / E)                               # (TB, E)
    q_row = jnp.sum(t.T, axis=0, keepdims=True)                # (1, TB)
    out_ref[...] = jnp.maximum(q_row, 0.0).astype(out_ref.dtype)


def _bn_sigmoid_kernel(q_ref, scale_ref, shift_ref, out_ref):
    """Elementwise epilogue: sigmoid(q * scale + shift) on lane-dense blocks."""
    q = q_ref[...].astype(jnp.float32)
    out_ref[...] = jax.nn.sigmoid(q * scale_ref[...] + shift_ref[...]).astype(out_ref.dtype)


def pack_params(params):
    """Pre-pack weights: fuse hyper_b_1 into hyper_w_1's first layer (do once)."""
    w1 = params["w1"].astype(jnp.float32)                  # (S, E)  [in, out]
    b1 = params["b1"].reshape(1, -1).astype(jnp.float32)   # (1, E)
    wb = params["wb"].reshape(-1, 1).astype(jnp.float32)   # (S, 1)
    bb = params["bb"].reshape(1, 1).astype(jnp.float32)    # (1, 1)
    wcat = jnp.concatenate([w1, wb], axis=1)               # (S, E+1)
    bcat = jnp.concatenate([b1, bb], axis=1)               # (1, E+1)
    w2 = params["w2"].astype(jnp.float32)                  # (E, E)
    b2 = params["b2"].reshape(1, -1).astype(jnp.float32)   # (1, E)
    return wcat, bcat, w2, b2


def lica_v_forward(act, states, params, *, block_rows=4096, return_batch_stats=False):
    """act: (bs, T, n_agents, n_actions); states: (bs, T, state_dim).

    states/act may be bf16; they are cast to f32 inside the kernel.
    """
    bs = states.shape[0]
    S = params["w1"].shape[0]
    E = params["w1"].shape[1]

    s2 = states.reshape(-1, S)
    a2 = act.reshape(-1, E)
    B = s2.shape[0]

    # Batch tile: multiple of 128 (lane-dense output blocks, unmasked stores),
    # balanced across blocks so padding stays small.
    tb_max = max(_LANES, _round_up(int(block_rows), _LANES))
    nb = max(1, -(-B // tb_max))
    TB = _round_up(-(-B // nb), _LANES)
    B_pad = nb * TB
    if B_pad != B:
        s2 = jnp.pad(s2, ((0, B_pad - B), (0, 0)))
        a2 = jnp.pad(a2, ((0, B_pad - B), (0, 0)))

    wcat, bcat, w2, b2 = pack_params(params)
    E1 = E + 1
    const = lambda i: (0, 0)

    bytes_in = B_pad * (S * s2.dtype.itemsize + E * a2.dtype.itemsize)
    cost1 = pl.CostEstimate(
        flops=int(B_pad * (2 * S * E1 + 2 * E * E + 4 * E)),
        transcendentals=0,
        bytes_accessed=int(bytes_in + 4 * (S * E1 + E1 + E * E + E + B_pad)))

    # Pass 1: pre-BN q, lane-dense (1, B_pad).  No cross-block carry -> parallel.
    # TODO(synk): if DMA wait shows up in traces at large TB, add
    # pipeline_mode=pl.Buffered(3) to the two streamed input specs.
    q_pre = pl.pallas_call(
        functools.partial(_q_pre_kernel, embed_dim=E),
        grid=(nb,),
        in_specs=[
            pl.BlockSpec((TB, S), lambda i: (i, 0)),   # states block
            pl.BlockSpec((TB, E), lambda i: (i, 0)),   # flattened action probs
            pl.BlockSpec((S, E1), const),              # [W1 | wb]
            pl.BlockSpec((1, E1), const),              # [b1 | bb]
            pl.BlockSpec((E, E), const),               # W2
            pl.BlockSpec((1, E), const),               # b2
        ],
        out_specs=pl.BlockSpec((1, TB), lambda i: (0, i)),
        out_shape=jax.ShapeDtypeStruct((1, B_pad), jnp.float32),
        compiler_params=pltpu.CompilerParams(
            dimension_semantics=("parallel",),
            vmem_limit_bytes=_vmem_limit_bytes(TB)),
        cost_estimate=cost1,
    )(s2, a2, wcat, bcat, w2, b2)

    # BatchNorm1d(1) train-mode statistics over the real (unpadded) batch.
    # Mean-centered (two-pass) variance avoids E[x^2]-E[x]^2 cancellation.
    q_valid = q_pre[0, :B]
    mean = jnp.mean(q_valid)
    var = jnp.mean(jnp.square(q_valid - mean))                 # biased, as BN uses
    rstd = jax.lax.rsqrt(var + _BN_EPS)
    gamma = params["gamma"].reshape(()).astype(jnp.float32)
    beta = params["beta"].reshape(()).astype(jnp.float32)
    scale = (gamma * rstd).reshape(1, 1)
    shift = (beta - mean * gamma * rstd).reshape(1, 1)

    # Pass 2: trivial normalize+sigmoid epilogue, lane-dense blocks.
    cost2 = pl.CostEstimate(flops=2 * B_pad, transcendentals=B_pad,
                            bytes_accessed=8 * B_pad + 8)
    q_sig = pl.pallas_call(
        _bn_sigmoid_kernel,
        grid=(nb,),
        in_specs=[
            pl.BlockSpec((1, TB), lambda i: (0, i)),
            pl.BlockSpec((1, 1), const),
            pl.BlockSpec((1, 1), const),
        ],
        out_specs=pl.BlockSpec((1, TB), lambda i: (0, i)),
        out_shape=jax.ShapeDtypeStruct((1, B_pad), jnp.float32),
        compiler_params=pltpu.CompilerParams(
            dimension_semantics=("parallel",),
            vmem_limit_bytes=8 << 20),
        cost_estimate=cost2,
    )(q_pre, scale, shift)

    q = q_sig[0, :B].reshape(bs, -1, 1)
    if return_batch_stats:
        n = float(B)
        var_unbiased = var * (n / max(n - 1.0, 1.0))
        # TODO(synk): PyTorch .train() mutates BN running_mean/running_var in
        # place; no Pallas equivalent — caller applies the momentum update
        # from these returned batch statistics.
        return q, (mean, var_unbiased)
    return q


def _reference_forward(act, states, params):
    """Pure-JAX reference mirroring the PyTorch module in train mode."""
    S = params["w1"].shape[0]
    E = params["w1"].shape[1]
    bs = states.shape[0]
    s = states.reshape(-1, S).astype(jnp.float32)
    a = act.reshape(-1, E).astype(jnp.float32)
    h = jnp.maximum(s @ params["w1"] + params["b1"].reshape(1, -1), 0.0)
    w1o = h @ params["w2"] + params["b2"].reshape(1, -1)
    b1 = s @ params["wb"].reshape(-1, 1) + params["bb"].reshape(1, 1)
    q = jnp.maximum(jnp.sum(a * w1o, axis=-1, keepdims=True) + b1, 0.0)
    mean = jnp.mean(q)
    var = jnp.mean((q - mean) ** 2)                      # biased, as BatchNorm uses
    q_hat = (q - mean) * jax.lax.rsqrt(var + _BN_EPS)
    q_bn = q_hat * params["gamma"].reshape(1, 1) + params["beta"].reshape(1, 1)
    return jax.nn.sigmoid(q_bn).reshape(bs, -1, 1)


if __name__ == "__main__":
    # Small shapes consistent with the module's forward.
    n_agents, n_actions = 4, 8
    embed_dim = n_agents * n_actions      # 32
    state_dim = 32                        # prod(args.state_shape)
    bs, T = 2, 8                          # B = bs*T = 16
    # args.mixing_embed_dim (hid_dim) is unused in the forward pass.

    key = jax.random.PRNGKey(0)
    ks = jax.random.split(key, 10)

    def init(k, shape, fan_in):
        bound = 1.0 / np.sqrt(fan_in)
        return jax.random.uniform(k, shape, jnp.float32, -bound, bound)

    params = {
        # hyper_w_1[0]: Linear(state_dim, embed_dim)   (stored as [in, out])
        "w1": init(ks[0], (state_dim, embed_dim), state_dim),
        "b1": init(ks[1], (1, embed_dim), state_dim),
        # hyper_w_1[2]: Linear(embed_dim, embed_dim)
        "w2": init(ks[2], (embed_dim, embed_dim), embed_dim),
        "b2": init(ks[3], (1, embed_dim), embed_dim),
        # hyper_b_1: Linear(state_dim, 1)
        "wb": init(ks[4], (state_dim, 1), state_dim),
        "bb": init(ks[5], (1, 1), state_dim),
        # BatchNorm1d(1, affine=True) default init
        "gamma": jnp.ones((1, 1), jnp.float32),
        "beta": jnp.zeros((1, 1), jnp.float32),
    }

    act = jax.nn.softmax(
        jax.random.normal(ks[6], (bs, T, n_agents, n_actions), jnp.float32), axis=-1)
    states = jax.random.normal(ks[7], (bs, T, state_dim), jnp.float32)
    ref = _reference_forward(act, states, params)

    # Default (single-block) path.
    out1 = jax.block_until_ready(lica_v_forward(act, states, params))

    # Multi-block path: B=160 with block_rows=128 -> 2 blocks of 128 rows
    # (exercises tiling, batch padding and the stats masking).
    bs2, T2 = 4, 40
    act2 = jax.nn.softmax(
        jax.random.normal(ks[8], (bs2, T2, n_agents, n_actions), jnp.float32), axis=-1)
    states2 = jax.random.normal(ks[9], (bs2, T2, state_dim), jnp.float32)
    ref2 = _reference_forward(act2, states2, params)
    out2, (bmean, bvar) = jax.block_until_ready(
        lica_v_forward(act2, states2, params, block_rows=128,
                       return_batch_stats=True))

    assert out1.shape == (bs, T, 1), out1.shape
    assert out2.shape == (bs2, T2, 1), out2.shape
    assert bool(jnp.all(jnp.isfinite(out1))) and bool(jnp.all(jnp.isfinite(out2)))
    assert bool(jnp.isfinite(bmean)) and bool(jnp.isfinite(bvar))
    assert bool(jnp.allclose(out1, ref, atol=1e-4, rtol=1e-4)), "single-block mismatch"
    assert bool(jnp.allclose(out2, ref2, atol=1e-4, rtol=1e-4)), "multi-block mismatch"
    print("KERNEL_OK")
</pallas_src>

<mosaic_0001>
module attributes {stable_mosaic.version = 11 : i64} {
  func.func @_q_pre_kernel(%arg0: i32, %arg1: memref<128x32xf32, #tpu.memory_space<vmem>>, %arg2: memref<128x32xf32, #tpu.memory_space<vmem>>, %arg3: memref<32x33xf32, #tpu.memory_space<vmem>>, %arg4: memref<1x33xf32, #tpu.memory_space<vmem>>, %arg5: memref<32x32xf32, #tpu.memory_space<vmem>>, %arg6: memref<1x32xf32, #tpu.memory_space<vmem>>, %arg7: memref<1x128xf32, #tpu.memory_space<vmem>>) attributes {dimension_semantics = [#tpu.dimension_semantics<parallel>], iteration_bounds = array<i64: 1>, scalar_prefetch = 0 : i64, scratch_operands = 0 : i64, tpu.core_type = #tpu.core_type<tc>, window_params = [{transform_indices = @transform_0, window_bounds = array<i64: 128, 32>}, {transform_indices = @transform_1, window_bounds = array<i64: 128, 32>}, {pipeline_mode = #tpu.pipeline_mode<synchronous>, transform_indices = @transform_2, window_bounds = array<i64: 32, 33>}, {pipeline_mode = #tpu.pipeline_mode<synchronous>, transform_indices = @transform_3, window_bounds = array<i64: 1, 33>}, {pipeline_mode = #tpu.pipeline_mode<synchronous>, transform_indices = @transform_4, window_bounds = array<i64: 32, 32>}, {pipeline_mode = #tpu.pipeline_mode<synchronous>, transform_indices = @transform_5, window_bounds = array<i64: 1, 32>}, {transform_indices = @transform_6, window_bounds = array<i64: 1, 128>}]} {
    %c0 = arith.constant 0 : index
    %c0_0 = arith.constant 0 : index
    %0 = vector.load %arg1[%c0, %c0_0] : memref<128x32xf32, #tpu.memory_space<vmem>>, vector<128x32xf32>
    %c0_1 = arith.constant 0 : index
    %c0_2 = arith.constant 0 : index
    %1 = vector.load %arg2[%c0_1, %c0_2] : memref<128x32xf32, #tpu.memory_space<vmem>>, vector<128x32xf32>
    %c0_3 = arith.constant 0 : index
    %c0_4 = arith.constant 0 : index
    %2 = vector.load %arg3[%c0_3, %c0_4] : memref<32x33xf32, #tpu.memory_space<vmem>>, vector<32x33xf32>
    %cst = arith.constant dense<0.000000e+00> : vector<128x33xf32>
    %3 = tpu.matmul %0, %2, %cst {dimension_numbers = #tpu.dot_dimension_numbers<[1], [0], [0], [1], [0, 0, 1, 1], [], []>} : vector<128x32xf32>, vector<32x33xf32>, vector<128x33xf32> -> vector<128x33xf32>
    %c0_5 = arith.constant 0 : index
    %c0_6 = arith.constant 0 : index
    %4 = vector.load %arg4[%c0_5, %c0_6] : memref<1x33xf32, #tpu.memory_space<vmem>>, vector<1x33xf32>
    %5 = vector.broadcast %4 : vector<1x33xf32> to vector<128x33xf32>
    %6 = arith.addf %3, %5 : vector<128x33xf32>
    %7 = vector.extract_strided_slice %6 {offsets = [0, 0], sizes = [128, 32], strides = [1, 1]} : vector<128x33xf32> to vector<128x32xf32>
    %cst_7 = arith.constant 0.000000e+00 : f32
    %8 = vector.broadcast %cst_7 : f32 to vector<128x32xf32>
    %9 = arith.maximumf %7, %8 : vector<128x32xf32>
    %10 = vector.extract_strided_slice %6 {offsets = [0, 32], sizes = [128, 1], strides = [1, 1]} : vector<128x33xf32> to vector<128x1xf32>
    %c0_8 = arith.constant 0 : index
    %c0_9 = arith.constant 0 : index
    %11 = vector.load %arg5[%c0_8, %c0_9] : memref<32x32xf32, #tpu.memory_space<vmem>>, vector<32x32xf32>
    %cst_10 = arith.constant dense<0.000000e+00> : vector<128x32xf32>
    %12 = tpu.matmul %9, %11, %cst_10 {dimension_numbers = #tpu.dot_dimension_numbers<[1], [0], [0], [1], [0, 0, 1, 1], [], []>} : vector<128x32xf32>, vector<32x32xf32>, vector<128x32xf32> -> vector<128x32xf32>
    %c0_11 = arith.constant 0 : index
    %c0_12 = arith.constant 0 : index
    %13 = vector.load %arg6[%c0_11, %c0_12] : memref<1x32xf32, #tpu.memory_space<vmem>>, vector<1x32xf32>
    %14 = vector.broadcast %13 : vector<1x32xf32> to vector<128x32xf32>
    %15 = arith.addf %12, %14 : vector<128x32xf32>
    %16 = arith.mulf %1, %15 : vector<128x32xf32>
    %cst_13 = arith.constant 3.125000e-02 : f32
    %17 = vector.broadcast %cst_13 : f32 to vector<128x1xf32>
    %18 = arith.mulf %10, %17 : vector<128x1xf32>
    %19 = vector.broadcast %18 : vector<128x1xf32> to vector<128x32xf32>
    %20 = arith.addf %16, %19 : vector<128x32xf32>
    %21 = tpu.transpose %20, [1, 0] : vector<128x32xf32> -> vector<32x128xf32>
    %cst_14 = arith.constant dense<0.000000e+00> : vector<128xf32>
    %22 = vector.multi_reduction <add>, %21, %cst_14 [0] : vector<32x128xf32> to vector<128xf32>
    %23 = vector.shape_cast %22 : vector<128xf32> to vector<1x128xf32>
    %cst_15 = arith.constant 0.000000e+00 : f32
    %24 = vector.broadcast %cst_15 : f32 to vector<1x128xf32>
    %25 = arith.maximumf %23, %24 : vector<1x128xf32>
    %c0_16 = arith.constant 0 : index
    %c0_17 = arith.constant 0 : index
    %26 = vector.load %arg7[%c0_16, %c0_17] : memref<1x128xf32, #tpu.memory_space<vmem>>, vector<1x128xf32>
    tpu.vector_store %arg7[%c0_16, %c0_17], %25 {strides = array<i32>} : memref<1x128xf32, #tpu.memory_space<vmem>>, vector<1x128xf32>,
    return
  }
  func.func @transform_0(%arg0: i32) -> (i32, i32) {
    %c0_i32 = arith.constant 0 : i32
    %c0_i32_0 = arith.constant 0 : i32
    return %arg0, %c0_i32 : i32, i32
  }
  func.func @transform_1(%arg0: i32) -> (i32, i32) {
    %c0_i32 = arith.constant 0 : i32
    %c0_i32_0 = arith.constant 0 : i32
    return %arg0, %c0_i32 : i32, i32
  }
  func.func @transform_2(%arg0: i32) -> (i32, i32) {
    %c0_i32 = arith.constant 0 : i32
    %c0_i32_0 = arith.constant 0 : i32
    %c0_i32_1 = arith.constant 0 : i32
    return %c0_i32, %c0_i32_0 : i32, i32
  }
  func.func @transform_3(%arg0: i32) -> (i32, i32) {
    %c0_i32 = arith.constant 0 : i32
    %c0_i32_0 = arith.constant 0 : i32
    %c0_i32_1 = arith.constant 0 : i32
    return %c0_i32, %c0_i32_0 : i32, i32
  }
  func.func @transform_4(%arg0: i32) -> (i32, i32) {
    %c0_i32 = arith.constant 0 : i32
    %c0_i32_0 = arith.constant 0 : i32
    %c0_i32_1 = arith.constant 0 : i32
    return %c0_i32, %c0_i32_0 : i32, i32
  }
  func.func @transform_5(%arg0: i32) -> (i32, i32) {
    %c0_i32 = arith.constant 0 : i32
    %c0_i32_0 = arith.constant 0 : i32
    %c0_i32_1 = arith.constant 0 : i32
    return %c0_i32, %c0_i32_0 : i32, i32
  }
  func.func @transform_6(%arg0: i32) -> (i32, i32) {
    %c0_i32 = arith.constant 0 : i32
    %c0_i32_0 = arith.constant 0 : i32
    return %c0_i32, %arg0 : i32, i32
  }
}

</mosaic_0001>

<llo_original>
// kernel: tpu_custom_call.1
$region0: #{tpu_custom_call.1}
  #allocation0 [shape = 'u32[]', space=smem, size = 0x4, offset = 0x4, fixed_abs, tag = 'smem constant byte address 0x4 - core index']
  #allocation1 [shape = 'u32[144,128]{1,0:T(1,128)}', space=vmem, size = 0x12000, scoped, tag = 'internal scratch']
  %s0 = inlined_call_operand.vmem [shape: f32[128,32], index: 0, kind: input, shape index: {}]
  %s1 = inlined_call_operand.vmem [shape: f32[128,32], index: 1, kind: input, shape index: {}]
  %s2 = inlined_call_operand.vmem [shape: f32[32,33], index: 2, kind: input, shape index: {}]
  %s3 = inlined_call_operand.vmem [shape: f32[1,33], index: 3, kind: input, shape index: {}]
  %s4 = inlined_call_operand.vmem [shape: f32[32,32], index: 4, kind: input, shape index: {}]
  %s5 = inlined_call_operand.vmem [shape: f32[1,32], index: 5, kind: input, shape index: {}]
  %s6 = inlined_call_operand.hbm [shape: f32[1,128], index: 6, kind: output, shape index: {}]
  %s7 = sld [smem:[#allocation0]]
  $region34: #{tpu_custom_call.1} parent=0
    _
  %s9 = ssub.s32 1, %s7
  %s10 = scalar_select 0, %s9, %s7
  $region1: #{tpu_custom_call.1} parent=0
    #allocation2 [shape = 'u8[512]{0}', space=vmem, size = 0x400, scoped, tag = 'output window, operand 0, single buffered']
    #allocation3 [shape = 's32[1]{0}', space=sflag, size = 0x4, scoped, tag = 'scoped memory for tpu_custom_call.1']
    %11 = vsyncpa [#allocation3], 0
    // Predicated region
    $region2: #{tpu_custom_call.1} parent=1 // pred_check
      _
    $region3: #{tpu_custom_call.1} parent=1 // pred_check_branch
      %13 = sbr.rel (0) target = $region5
    $region4: #{tpu_custom_call.1} parent=1 // pred_region
      _
    $region5: #{tpu_custom_call.1} parent=1 // pred_fallthru
      _
    // Predicated region
    $region6: #{tpu_custom_call.1} parent=1 // pred_check
      _
    $region7: #{tpu_custom_call.1} parent=1 // pred_check_branch
      %15 = sbr.rel (0) target = $region9
    $region8: #{tpu_custom_call.1} parent=1 // pred_region
      _
    $region9: #{tpu_custom_call.1} parent=1 // pred_fallthru
      _
    // Predicated region
    $region10: #{tpu_custom_call.1} parent=1 // pred_check
      _
    $region11: #{tpu_custom_call.1} parent=1 // pred_check_branch
      %17 = sbr.rel (0) target = $region13
    $region12: #{tpu_custom_call.1} parent=1 // pred_region
      _
    $region13: #{tpu_custom_call.1} parent=1 // pred_fallthru
      _
    // Predicated region
    $region14: #{tpu_custom_call.1} parent=1 // pred_check
      _
    $region15: #{tpu_custom_call.1} parent=1 // pred_check_branch
      %19 = sbr.rel (0) target = $region17
    $region16: #{tpu_custom_call.1} parent=1 // pred_region
      _
    $region17: #{tpu_custom_call.1} parent=1 // pred_fallthru
      _
    // Predicated region
    $region18: #{tpu_custom_call.1} parent=1 // pred_check
      _
    $region19: #{tpu_custom_call.1} parent=1 // pred_check_branch
      %21 = sbr.rel (0) target = $region21
    $region20: #{tpu_custom_call.1} parent=1 // pred_region
      _
    $region21: #{tpu_custom_call.1} parent=1 // pred_fallthru
      _
    // Predicated region
    $region22: #{tpu_custom_call.1} parent=1 // pred_check
      _
    $region23: #{tpu_custom_call.1} parent=1 // pred_check_branch
      %23 = sbr.rel (0) target = $region25
    $region24: #{tpu_custom_call.1} parent=1 // pred_region
      _
    $region25: #{tpu_custom_call.1} parent=1 // pred_fallthru
      _
    %v24 = vld [vmem:[%s0] sm:$0xff]
    %v25 = vld [vmem:[%s0 + $0x8] sm:$0xff]
    %v26 = vld [vmem:[%s0 + $0x10] sm:$0xff]
    %v27 = vld [vmem:[%s0 + $0x18] sm:$0xff]
    %v28 = vld [vmem:[%s0 + $0x20] sm:$0xff]
    %v29 = vld [vmem:[%s0 + $0x28] sm:$0xff]
    %v30 = vld [vmem:[%s0 + $0x30] sm:$0xff]
    %v31 = vld [vmem:[%s0 + $0x38] sm:$0xff]
    %v32 = vld [vmem:[%s0 + $0x40] sm:$0xff]
    %v33 = vld [vmem:[%s0 + $0x48] sm:$0xff]
    %v34 = vld [vmem:[%s0 + $0x50] sm:$0xff]
    %v35 = vld [vmem:[%s0 + $0x58] sm:$0xff]
    %v36 = vld [vmem:[%s0 + $0x60] sm:$0xff]
    %v37 = vld [vmem:[%s0 + $0x68] sm:$0xff]
    %v38 = vld [vmem:[%s0 + $0x70] sm:$0xff]
    %v39 = vld [vmem:[%s0 + $0x78] sm:$0xff]
    %v40 = vld [vmem:[%s1] sm:$0xff]
    %v41 = vld [vmem:[%s1 + $0x8] sm:$0xff]
    %v42 = vld [vmem:[%s1 + $0x10] sm:$0xff]
    %v43 = vld [vmem:[%s1 + $0x18] sm:$0xff]
    %v44 = vld [vmem:[%s1 + $0x20] sm:$0xff]
    %v45 = vld [vmem:[%s1 + $0x28] sm:$0xff]
    %v46 = vld [vmem:[%s1 + $0x30] sm:$0xff]
    %v47 = vld [vmem:[%s1 + $0x38] sm:$0xff]
    %v48 = vld [vmem:[%s1 + $0x40] sm:$0xff]
    %v49 = vld [vmem:[%s1 + $0x48] sm:$0xff]
    %v50 = vld [vmem:[%s1 + $0x50] sm:$0xff]
    %v51 = vld [vmem:[%s1 + $0x58] sm:$0xff]
    %v52 = vld [vmem:[%s1 + $0x60] sm:$0xff]
    %v53 = vld [vmem:[%s1 + $0x68] sm:$0xff]
    %v54 = vld [vmem:[%s1 + $0x70] sm:$0xff]
    %v55 = vld [vmem:[%s1 + $0x78] sm:$0xff]
    %v56 = vld [vmem:[%s2] sm:$0xff]
    %v57 = vld [vmem:[%s2 + $0x8] sm:$0xff]
    %v58 = vld [vmem:[%s2 + $0x10] sm:$0xff]
    %v59 = vld [vmem:[%s2 + $0x18] sm:$0xff]
    %v60 = vld [vmem:[%s3] sm:$0x1]
    %v62 = vlaneseq
    %v63 = vshrl.u32 %v62, 7
    %v64 = vsub.s32 0, %v63
    %v65 = vrot.slane %v60, %v64
    %vm67 = vcmask 261120
    %v69 = vsel %vm67, %v24, 0
    %v72 = vsel %vm67, %v25, 0
    %v75 = vsel %vm67, %v26, 0
    %v78 = vsel %vm67, %v27, 0
    %v81 = vsel %vm67, %v28, 0
    %v84 = vsel %vm67, %v29, 0
    %v87 = vsel %vm67, %v30, 0
    %v90 = vsel %vm67, %v31, 0
    %v93 = vsel %vm67, %v32, 0
    %v96 = vsel %vm67, %v33, 0
    %v99 = vsel %vm67, %v34, 0
    %v102 = vsel %vm67, %v35, 0
    %v105 = vsel %vm67, %v36, 0
    %v108 = vsel %vm67, %v37, 0
    %v111 = vsel %vm67, %v38, 0
    %v114 = vsel %vm67, %v39, 0
    %116 = vmatprep.subr.mxu0 0.0
    %117 = vmatpush1.msra.mxu0 0.0
    %118 = vmatprep.subr.mxu0 0.0
    %119 = vmatpush1.msra.mxu0 0.0
    %120 = vmatprep.subr.mxu0 0.0
    %121 = vmatpush1.msra.mxu0 0.0
    %122 = vmatprep.subr.mxu0 0.0
    %123 = vmatpush1.msra.mxu0 0.0
    %124 = vmatprep.subr.mxu0 0.0
    %125 = vmatpush1.msra.mxu0 0.0
    %126 = vmatprep.subr.mxu0 0.0
    %127 = vmatpush1.msra.mxu0 0.0
    %128 = vmatprep.subr.mxu0 0.0
    %129 = vmatpush1.msra.mxu0 0.0
    %130 = vmatprep.subr.mxu0 0.0
    %131 = vmatpush1.msra.mxu0 0.0
    %132 = vmatprep.subr.mxu0 0.0
    %133 = vmatpush1.msra.mxu0 0.0
    %134 = vmatprep.subr.mxu0 0.0
    %135 = vmatpush1.msra.mxu0 0.0
    %136 = vmatprep.subr.mxu0 0.0
    %137 = vmatpush1.msra.mxu0 0.0
    %138 = vmatprep.subr.mxu0 0.0
    %139 = vmatpush1.msra.mxu0 0.0
    %140 = vmatprep.subr.mxu0 0.0
    %141 = vmatpush1.msra.mxu0 %v59
    %142 = vmatprep.subr.mxu0 0.0
    %143 = vmatpush1.msra.mxu0 %v58
    %144 = vmatprep.subr.mxu0 0.0
    %145 = vmatpush1.msra.mxu0 %v57
    %146 = vmatprep.subr.mxu0 0.0
    %147 = vmatpush1.msra.mxu0 %v56
    %148 = vmatprep.subr.mxu0 0.0
    %149 = vmatpush2.msra.mxu0 0.0
    %150 = vmatprep.subr.mxu0 0.0
    %151 = vmatpush2.msra.mxu0 0.0
    %152 = vmatprep.subr.mxu0 0.0
    %153 = vmatpush2.msra.mxu0 0.0
    %154 = vmatprep.subr.mxu0 0.0
    %155 = vmatpush2.msra.mxu0 0.0
    %156 = vmatprep.subr.mxu0 0.0
    %157 = vmatpush2.msra.mxu0 0.0
    %158 = vmatprep.subr.mxu0 0.0
    %159 = vmatpush2.msra.mxu0 0.0
    %160 = vmatprep.subr.mxu0 0.0
    %161 = vmatpush2.msra.mxu0 0.0
    %162 = vmatprep.subr.mxu0 0.0
    %163 = vmatpush2.msra.mxu0 0.0
    %164 = vmatprep.subr.mxu0 0.0
    %165 = vmatpush2.msra.mxu0 0.0
    %166 = vmatprep.subr.mxu0 0.0
    %167 = vmatpush2.msra.mxu0 0.0
    %168 = vmatprep.subr.mxu0 0.0
    %169 = vmatpush2.msra.mxu0 0.0
    %170 = vmatprep.subr.mxu0 0.0
    %171 = vmatpush2.msra.mxu0 0.0
    %172 = vmatprep.subr.mxu0 0.0
    %173 = vmatpush2.msra.mxu0 0.0
    %174 = vmatprep.subr.mxu0 0.0
    %175 = vmatpush2.msra.mxu0 0.0
    %176 = vmatprep.subr.mxu0 0.0
    %177 = vmatpush2.msra.mxu0 0.0
    %178 = vmatprep.subr.mxu0 0.0
    %179 = vmatpush2.msra.mxu0 0.0
    %180 = vmatprep.mubr.f32.mxu0 0.0
    %181 = vmatmul.mubr.f32.gmra.mxu0 %v69
    %v182 = vpop.f32.mrf.mxu0
    %v183 = vadd.f32 %v65, %v182
    %v184 = vpop.f32.mrf.mxu0
    %185 = vmatprep.mubr.f32.mxu0 0.0
    %186 = vmatmul.mubr.f32.gmra.mxu0 %v72
    %v187 = vpop.f32.mrf.mxu0
    %v188 = vadd.f32 %v65, %v187
    %v189 = vpop.f32.mrf.mxu0
    %190 = vmatprep.mubr.f32.mxu0 0.0
    %191 = vmatmul.mubr.f32.gmra.mxu0 %v75
    %v192 = vpop.f32.mrf.mxu0
    %v193 = vadd.f32 %v65, %v192
    %v194 = vpop.f32.mrf.mxu0
    %195 = vmatprep.mubr.f32.mxu0 0.0
    %196 = vmatmul.mubr.f32.gmra.mxu0 %v78
    %v197 = vpop.f32.mrf.mxu0
    %v198 = vadd.f32 %v65, %v197
    %v199 = vpop.f32.mrf.mxu0
    %200 = vmatprep.mubr.f32.mxu0 0.0
    %201 = vmatmul.mubr.f32.gmra.mxu0 %v81
    %v202 = vpop.f32.mrf.mxu0
    %v203 = vadd.f32 %v65, %v202
    %v204 = vpop.f32.mrf.mxu0
    %205 = vmatprep.mubr.f32.mxu0 0.0
    %206 = vmatmul.mubr.f32.gmra.mxu0 %v84
    %v207 = vpop.f32.mrf.mxu0
    %v208 = vadd.f32 %v65, %v207
    %v209 = vpop.f32.mrf.mxu0
    %210 = vmatprep.mubr.f32.mxu0 0.0
    %211 = vmatmul.mubr.f32.gmra.mxu0 %v87
    %v212 = vpop.f32.mrf.mxu0
    %v213 = vadd.f32 %v65, %v212
    %v214 = vpop.f32.mrf.mxu0
    %215 = vmatprep.mubr.f32.mxu0 0.0
    %216 = vmatmul.mubr.f32.gmra.mxu0 %v90
    %v217 = vpop.f32.mrf.mxu0
    %v218 = vadd.f32 %v65, %v217
    %v219 = vpop.f32.mrf.mxu0
    %220 = vmatprep.mubr.f32.mxu0 0.0
    %221 = vmatmul.mubr.f32.gmra.mxu0 %v93
    %v222 = vpop.f32.mrf.mxu0
    %v223 = vadd.f32 %v65, %v222
    %v224 = vpop.f32.mrf.mxu0
    %225 = vmatprep.mubr.f32.mxu0 0.0
    %226 = vmatmul.mubr.f32.gmra.mxu0 %v96
    %v227 = vpop.f32.mrf.mxu0
    %v228 = vadd.f32 %v65, %v227
    %v229 = vpop.f32.mrf.mxu0
    %230 = vmatprep.mubr.f32.mxu0 0.0
    %231 = vmatmul.mubr.f32.gmra.mxu0 %v99
    %v232 = vpop.f32.mrf.mxu0
    %v233 = vadd.f32 %v65, %v232
    %v234 = vpop.f32.mrf.mxu0
    %235 = vmatprep.mubr.f32.mxu0 0.0
    %236 = vmatmul.mubr.f32.gmra.mxu0 %v102
    %v237 = vpop.f32.mrf.mxu0
    %v238 = vadd.f32 %v65, %v237
    %v239 = vpop.f32.mrf.mxu0
    %240 = vmatprep.mubr.f32.mxu0 0.0
    %241 = vmatmul.mubr.f32.gmra.mxu0 %v105
    %v242 = vpop.f32.mrf.mxu0
    %v243 = vadd.f32 %v65, %v242
    %v244 = vpop.f32.mrf.mxu0
    %245 = vmatprep.mubr.f32.mxu0 0.0
    %246 = vmatmul.mubr.f32.gmra.mxu0 %v108
    %v247 = vpop.f32.mrf.mxu0
    %v248 = vadd.f32 %v65, %v247
    %v249 = vpop.f32.mrf.mxu0
    %250 = vmatprep.mubr.f32.mxu0 0.0
    %251 = vmatmul.mubr.f32.gmra.mxu0 %v111
    %v252 = vpop.f32.mrf.mxu0
    %v253 = vadd.f32 %v65, %v252
    %v254 = vpop.f32.mrf.mxu0
    %255 = vmatprep.mubr.f32.mxu0 0.0
    %256 = vmatmul.mubr.f32.gmra.mxu0 %v114
    %v257 = vpop.f32.mrf.mxu0
    %v258 = vadd.f32 %v65, %v257
    %v259 = vpop.f32.mrf.mxu0
    %260 = vdwg.mxu0
    %v261 = vmax.f32 %v183, 0.0
    %v262 = vmax.f32 %v188, 0.0
    %v263 = vmax.f32 %v193, 0.0
    %v264 = vmax.f32 %v198, 0.0
    %v265 = vmax.f32 %v203, 0.0
    %v266 = vmax.f32 %v208, 0.0
    %v267 = vmax.f32 %v213, 0.0
    %v268 = vmax.f32 %v218, 0.0
    %v269 = vmax.f32 %v223, 0.0
    %v270 = vmax.f32 %v228, 0.0
    %v271 = vmax.f32 %v233, 0.0
    %v272 = vmax.f32 %v238, 0.0
    %v273 = vmax.f32 %v243, 0.0
    %v274 = vmax.f32 %v248, 0.0
    %v275 = vmax.f32 %v253, 0.0
    %v276 = vmax.f32 %v258, 0.0
    %v277 = vld [vmem:[%s4] sm:$0xff]
    %v278 = vld [vmem:[%s4 + $0x8] sm:$0xff]
    %v279 = vld [vmem:[%s4 + $0x10] sm:$0xff]
    %v280 = vld [vmem:[%s4 + $0x18] sm:$0xff]
    %v281 = vld [vmem:[%s5] sm:$0x1]
    %v283 = vlaneseq
    %v284 = vshrl.u32 %v283, 7
    %v285 = vsub.s32 0, %v284
    %v286 = vrot.slane %v281, %v285
    %v289 = vsel %vm67, %v261, 0
    %v292 = vsel %vm67, %v262, 0
    %v295 = vsel %vm67, %v263, 0
    %v298 = vsel %vm67, %v264, 0
    %v301 = vsel %vm67, %v265, 0
    %v304 = vsel %vm67, %v266, 0
    %v307 = vsel %vm67, %v267, 0
    %v310 = vsel %vm67, %v268, 0
    %v313 = vsel %vm67, %v269, 0
    %v316 = vsel %vm67, %v270, 0
    %v319 = vsel %vm67, %v271, 0
    %v322 = vsel %vm67, %v272, 0
    %v325 = vsel %vm67, %v273, 0
    %v328 = vsel %vm67, %v274, 0
    %v331 = vsel %vm67, %v275, 0
    %v334 = vsel %vm67, %v276, 0
    %336 = vmatprep.subr.mxu0 0.0
    %337 = vmatpush1.msra.mxu0 0.0
    %338 = vmatprep.subr.mxu0 0.0
    %339 = vmatpush1.msra.mxu0 0.0
    %340 = vmatprep.subr.mxu0 0.0
    %341 = vmatpush1.msra.mxu0 0.0
    %342 = vmatprep.subr.mxu0 0.0
    %343 = vmatpush1.msra.mxu0 0.0
    %344 = vmatprep.subr.mxu0 0.0
    %345 = vmatpush1.msra.mxu0 0.0
    %346 = vmatprep.subr.mxu0 0.0
    %347 = vmatpush1.msra.mxu0 0.0
    %348 = vmatprep.subr.mxu0 0.0
    %349 = vmatpush1.msra.mxu0 0.0
    %350 = vmatprep.subr.mxu0 0.0
    %351 = vmatpush1.msra.mxu0 0.0
    %352 = vmatprep.subr.mxu0 0.0
    %353 = vmatpush1.msra.mxu0 0.0
    %354 = vmatprep.subr.mxu0 0.0
    %355 = vmatpush1.msra.mxu0 0.0
    %356 = vmatprep.subr.mxu0 0.0
    %357 = vmatpush1.msra.mxu0 0.0
    %358 = vmatprep.subr.mxu0 0.0
    %359 = vmatpush1.msra.mxu0 0.0
    %360 = vmatprep.subr.mxu0 0.0
    %361 = vmatpush1.msra.mxu0 %v280
    %362 = vmatprep.subr.mxu0 0.0
    %363 = vmatpush1.msra.mxu0 %v279
    %364 = vmatprep.subr.mxu0 0.0
    %365 = vmatpush1.msra.mxu0 %v278
    %366 = vmatprep.subr.mxu0 0.0
    %367 = vmatpush1.msra.mxu0 %v277
    %368 = vmatprep.subr.mxu0 0.0
    %369 = vmatpush2.msra.mxu0 0.0
    %370 = vmatprep.subr.mxu0 0.0
    %371 = vmatpush2.msra.mxu0 0.0
    %372 = vmatprep.subr.mxu0 0.0
    %373 = vmatpush2.msra.mxu0 0.0
    %374 = vmatprep.subr.mxu0 0.0
    %375 = vmatpush2.msra.mxu0 0.0
    %376 = vmatprep.subr.mxu0 0.0
    %377 = vmatpush2.msra.mxu0 0.0
    %378 = vmatprep.subr.mxu0 0.0
    %379 = vmatpush2.msra.mxu0 0.0
    %380 = vmatprep.subr.mxu0 0.0
    %381 = vmatpush2.msra.mxu0 0.0
    %382 = vmatprep.subr.mxu0 0.0
    %383 = vmatpush2.msra.mxu0 0.0
    %384 = vmatprep.subr.mxu0 0.0
    %385 = vmatpush2.msra.mxu0 0.0
    %386 = vmatprep.subr.mxu0 0.0
    %387 = vmatpush2.msra.mxu0 0.0
    %388 = vmatprep.subr.mxu0 0.0
    %389 = vmatpush2.msra.mxu0 0.0
    %390 = vmatprep.subr.mxu0 0.0
    %391 = vmatpush2.msra.mxu0 0.0
    %392 = vmatprep.subr.mxu0 0.0
    %393 = vmatpush2.msra.mxu0 0.0
    %394 = vmatprep.subr.mxu0 0.0
    %395 = vmatpush2.msra.mxu0 0.0
    %396 = vmatprep.subr.mxu0 0.0
    %397 = vmatpush2.msra.mxu0 0.0
    %398 = vmatprep.subr.mxu0 0.0
    %399 = vmatpush2.msra.mxu0 0.0
    %400 = vmatprep.mubr.f32.mxu0 0.0
    %401 = vmatmul.mubr.f32.gmra.mxu0 %v289
    %v402 = vpop.f32.mrf.mxu0
    %v403 = vadd.f32 %v286, %v402
    %v404 = vpop.f32.mrf.mxu0
    %405 = vmatprep.mubr.f32.mxu0 0.0
    %406 = vmatmul.mubr.f32.gmra.mxu0 %v292
    %v407 = vpop.f32.mrf.mxu0
    %v408 = vadd.f32 %v286, %v407
    %v409 = vpop.f32.mrf.mxu0
    %410 = vmatprep.mubr.f32.mxu0 0.0
    %411 = vmatmul.mubr.f32.gmra.mxu0 %v295
    %v412 = vpop.f32.mrf.mxu0
    %v413 = vadd.f32 %v286, %v412
    %v414 = vpop.f32.mrf.mxu0
    %415 = vmatprep.mubr.f32.mxu0 0.0
    %416 = vmatmul.mubr.f32.gmra.mxu0 %v298
    %v417 = vpop.f32.mrf.mxu0
    %v418 = vadd.f32 %v286, %v417
    %v419 = vpop.f32.mrf.mxu0
    %420 = vmatprep.mubr.f32.mxu0 0.0
    %421 = vmatmul.mubr.f32.gmra.mxu0 %v301
    %v422 = vpop.f32.mrf.mxu0
    %v423 = vadd.f32 %v286, %v422
    %v424 = vpop.f32.mrf.mxu0
    %425 = vmatprep.mubr.f32.mxu0 0.0
    %426 = vmatmul.mubr.f32.gmra.mxu0 %v304
    %v427 = vpop.f32.mrf.mxu0
    %v428 = vadd.f32 %v286, %v427
    %v429 = vpop.f32.mrf.mxu0
    %430 = vmatprep.mubr.f32.mxu0 0.0
    %431 = vmatmul.mubr.f32.gmra.mxu0 %v307
    %v432 = vpop.f32.mrf.mxu0
    %v433 = vadd.f32 %v286, %v432
    %v434 = vpop.f32.mrf.mxu0
    %435 = vmatprep.mubr.f32.mxu0 0.0
    %436 = vmatmul.mubr.f32.gmra.mxu0 %v310
    %v437 = vpop.f32.mrf.mxu0
    %v438 = vadd.f32 %v286, %v437
    %v439 = vpop.f32.mrf.mxu0
    %440 = vmatprep.mubr.f32.mxu0 0.0
    %441 = vmatmul.mubr.f32.gmra.mxu0 %v313
    %v442 = vpop.f32.mrf.mxu0
    %v443 = vadd.f32 %v286, %v442
    %v444 = vpop.f32.mrf.mxu0
    %445 = vmatprep.mubr.f32.mxu0 0.0
    %446 = vmatmul.mubr.f32.gmra.mxu0 %v316
    %v447 = vpop.f32.mrf.mxu0
    %v448 = vadd.f32 %v286, %v447
    %v449 = vpop.f32.mrf.mxu0
    %450 = vmatprep.mubr.f32.mxu0 0.0
    %451 = vmatmul.mubr.f32.gmra.mxu0 %v319
    %v452 = vpop.f32.mrf.mxu0
    %v453 = vadd.f32 %v286, %v452
    %v454 = vpop.f32.mrf.mxu0
    %455 = vmatprep.mubr.f32.mxu0 0.0
    %456 = vmatmul.mubr.f32.gmra.mxu0 %v322
    %v457 = vpop.f32.mrf.mxu0
    %v458 = vadd.f32 %v286, %v457
    %v459 = vpop.f32.mrf.mxu0
    %460 = vmatprep.mubr.f32.mxu0 0.0
    %461 = vmatmul.mubr.f32.gmra.mxu0 %v325
    %v462 = vpop.f32.mrf.mxu0
    %v463 = vadd.f32 %v286, %v462
    %v464 = vpop.f32.mrf.mxu0
    %465 = vmatprep.mubr.f32.mxu0 0.0
    %466 = vmatmul.mubr.f32.gmra.mxu0 %v328
    %v467 = vpop.f32.mrf.mxu0
    %v468 = vadd.f32 %v286, %v467
    %v469 = vpop.f32.mrf.mxu0
    %470 = vmatprep.mubr.f32.mxu0 0.0
    %471 = vmatmul.mubr.f32.gmra.mxu0 %v331
    %v472 = vpop.f32.mrf.mxu0
    %v473 = vadd.f32 %v286, %v472
    %v474 = vpop.f32.mrf.mxu0
    %475 = vmatprep.mubr.f32.mxu0 0.0
    %476 = vmatmul.mubr.f32.gmra.mxu0 %v334
    %v477 = vpop.f32.mrf.mxu0
    %v478 = vadd.f32 %v286, %v477
    %v479 = vpop.f32.mrf.mxu0
    %480 = vdwg.mxu0
    %v481 = vmul.f32 %v40, %v403
    %v482 = vmul.f32 %v41, %v408
    %v483 = vmul.f32 %v42, %v413
    %v484 = vmul.f32 %v43, %v418
    %v485 = vmul.f32 %v44, %v423
    %v486 = vmul.f32 %v45, %v428
    %v487 = vmul.f32 %v46, %v433
    %v488 = vmul.f32 %v47, %v438
    %v489 = vmul.f32 %v48, %v443
    %v490 = vmul.f32 %v49, %v448
    %v491 = vmul.f32 %v50, %v453
    %v492 = vmul.f32 %v51, %v458
    %v493 = vmul.f32 %v52, %v463
    %v494 = vmul.f32 %v53, %v468
    %v495 = vmul.f32 %v54, %v473
    %v496 = vmul.f32 %v55, %v478
    %v497 = vmul.f32 %v183, 0.03125
    %v498 = vmul.f32 %v188, 0.03125
    %v499 = vmul.f32 %v193, 0.03125
    %v500 = vmul.f32 %v198, 0.03125
    %v501 = vmul.f32 %v203, 0.03125
    %v502 = vmul.f32 %v208, 0.03125
    %v503 = vmul.f32 %v213, 0.03125
    %v504 = vmul.f32 %v218, 0.03125
    %v505 = vmul.f32 %v223, 0.03125
    %v506 = vmul.f32 %v228, 0.03125
    %v507 = vmul.f32 %v233, 0.03125
    %v508 = vmul.f32 %v238, 0.03125
    %v509 = vmul.f32 %v243, 0.03125
    %v510 = vmul.f32 %v248, 0.03125
    %v511 = vmul.f32 %v253, 0.03125
    %v512 = vmul.f32 %v258, 0.03125
    %514 = vset.pattern.permute.xlu0 32
    %515 = vperm.xlu0 %514, %v497
    %v516 = vpop.permute.xlu0 %515
    %519 = vset.pattern.permute.xlu0 32
    %520 = vperm.xlu0 %519, %v498
    %v521 = vpop.permute.xlu0 %520
    %524 = vset.pattern.permute.xlu0 32
    %525 = vperm.xlu0 %524, %v499
    %v526 = vpop.permute.xlu0 %525
    %529 = vset.pattern.permute.xlu0 32
    %530 = vperm.xlu0 %529, %v500
    %v531 = vpop.permute.xlu0 %530
    %534 = vset.pattern.permute.xlu0 32
    %535 = vperm.xlu0 %534, %v501
    %v536 = vpop.permute.xlu0 %535
    %539 = vset.pattern.permute.xlu0 32
    %540 = vperm.xlu0 %539, %v502
    %v541 = vpop.permute.xlu0 %540
    %544 = vset.pattern.permute.xlu0 32
    %545 = vperm.xlu0 %544, %v503
    %v546 = vpop.permute.xlu0 %545
    %549 = vset.pattern.permute.xlu0 32
    %550 = vperm.xlu0 %549, %v504
    %v551 = vpop.permute.xlu0 %550
    %554 = vset.pattern.permute.xlu0 32
    %555 = vperm.xlu0 %554, %v505
    %v556 = vpop.permute.xlu0 %555
    %559 = vset.pattern.permute.xlu0 32
    %560 = vperm.xlu0 %559, %v506
    %v561 = vpop.permute.xlu0 %560
    %564 = vset.pattern.permute.xlu0 32
    %565 = vperm.xlu0 %564, %v507
    %v566 = vpop.permute.xlu0 %565
    %569 = vset.pattern.permute.xlu0 32
    %570 = vperm.xlu0 %569, %v508
    %v571 = vpop.permute.xlu0 %570
    %574 = vset.pattern.permute.xlu0 32
    %575 = vperm.xlu0 %574, %v509
    %v576 = vpop.permute.xlu0 %575
    %579 = vset.pattern.permute.xlu0 32
    %580 = vperm.xlu0 %579, %v510
    %v581 = vpop.permute.xlu0 %580
    %584 = vset.pattern.permute.xlu0 32
    %585 = vperm.xlu0 %584, %v511
    %v586 = vpop.permute.xlu0 %585
    %589 = vset.pattern.permute.xlu0 32
    %590 = vperm.xlu0 %589, %v512
    %v591 = vpop.permute.xlu0 %590
    %v593 = vadd.f32 %v481, %v516
    %v594 = vadd.f32 %v482, %v521
    %v595 = vadd.f32 %v483, %v526
    %v596 = vadd.f32 %v484, %v531
    %v597 = vadd.f32 %v485, %v536
    %v598 = vadd.f32 %v486, %v541
    %v599 = vadd.f32 %v487, %v546
    %v600 = vadd.f32 %v488, %v551
    %v601 = vadd.f32 %v489, %v556
    %v602 = vadd.f32 %v490, %v561
    %v603 = vadd.f32 %v491, %v566
    %v604 = vadd.f32 %v492, %v571
    %v605 = vadd.f32 %v493, %v576
    %v606 = vadd.f32 %v494, %v581
    %v607 = vadd.f32 %v495, %v586
    %v608 = vadd.f32 %v496, %v591
    %609 = vxpose.xlu0.b32.start [1/16] %v593, 128
    %610 = vxpose.xlu0.b32.cont [2/16] %v594, 128
    %611 = vxpose.xlu0.b32.cont [3/16] %v595, 128
    %612 = vxpose.xlu0.b32.cont [4/16] %v596, 128
    %613 = vxpose.xlu0.b32.cont [5/16] %v597, 128
    %614 = vxpose.xlu0.b32.cont [6/16] %v598, 128
    %615 = vxpose.xlu0.b32.cont [7/16] %v599, 128
    %616 = vxpose.xlu0.b32.cont [8/16] %v600, 128
    %617 = vxpose.xlu0.b32.cont [9/16] %v601, 128
    %618 = vxpose.xlu0.b32.cont [10/16] %v602, 128
    %619 = vxpose.xlu0.b32.cont [11/16] %v603, 128
    %620 = vxpose.xlu0.b32.cont [12/16] %v604, 128
    %621 = vxpose.xlu0.b32.cont [13/16] %v605, 128
    %622 = vxpose.xlu0.b32.cont [14/16] %v606, 128
    %623 = vxpose.xlu0.b32.cont [15/16] %v607, 128
    %624 = vxpose.xlu0.b32.end [16/16] %v608, 128
    %v625 = vpop.trf.xlu0
    %v626 = vpop.trf.xlu0
    %v627 = vpop.trf.xlu0
    %v628 = vpop.trf.xlu0
    %v629 = vpop.trf.xlu0
    %v630 = vpop.trf.xlu0
    %v631 = vpop.trf.xlu0
    %v632 = vpop.trf.xlu0
    %v633 = vpop.trf.xlu0
    %v634 = vpop.trf.xlu0
    %v635 = vpop.trf.xlu0
    %v636 = vpop.trf.xlu0
    %v637 = vpop.trf.xlu0
    %v638 = vpop.trf.xlu0
    %v639 = vpop.trf.xlu0
    %v640 = vpop.trf.xlu0
    %v641 = vadd.f32 %v625, %v626
    %v642 = vadd.f32 %v641, %v627
    %v643 = vadd.f32 %v642, %v628
    %v644 = vrot.slane %v643, 4
    %v645 = vadd.f32 %v643, %v644
    %v646 = vrot.slane %v645, 2
    %v647 = vadd.f32 %v645, %v646
    %v648 = vrot.slane %v647, 1
    %v649 = vadd.f32 %v647, %v648
    %v650 = vmax.f32 %v649, 0.0
    %651 = vst [vmem:[#allocation2] sm:$0x1] %v650
    // Predicated region
    $region26: #{tpu_custom_call.1} parent=1 // pred_check
      _
    $region27: #{tpu_custom_call.1} parent=1 // pred_check_branch
      %653 = sbr.rel (0) target = $region29
    $region28: #{tpu_custom_call.1} parent=1 // pred_region
      %s655 = ssub.s32 16, 16
      %656 = vsyncadd [#allocation3], %s655
      %s658 = sshll.u32 [#allocation2], 4
      %s659 = int_to_ptr.vmem [resolvable:$true] %s658
      %661 = dma.vmem_to_hbm [thread:$0]  %s659, 16, %s6, [#allocation3]
    $region29: #{tpu_custom_call.1} parent=1 // pred_fallthru
      _
    // Predicated region
    $region30: #{tpu_custom_call.1} parent=1 // pred_check
      _
    $region31: #{tpu_custom_call.1} parent=1 // pred_check_branch
      %663 = sbr.rel (0) target = $region33
    $region32: #{tpu_custom_call.1} parent=1 // pred_region
      %664 = dma.done [#allocation3], 16
    $region33: #{tpu_custom_call.1} parent=1 // pred_fallthru
      _
    %665 = vsyncpa [#allocation3], 1

</llo_original>
